<compile_context>
chip_gen: v5e
topology: v5e:2x2
jax: 0.10.0
libtpu: 0.0.40
codegen_flags: <defaults>
</compile_context>

<pallas_src>
import functools

import jax
import jax.numpy as jnp
from jax.experimental import pallas as pl
from jax.experimental.pallas import tpu as pltpu

_LANE = 128
_SUBLANE = 8

# Conservative, v7x-safe VMEM numbers (v7x has only 64 MiB per TensorCore;
# v5e/v6e have 128 MiB and could go larger for very wide C, but gains taper).
# TODO(synk): make these generation-aware (pltpu.get_tpu_info) for wide-C f32.
_VMEM_LIMIT_BYTES = 32 * 1024 * 1024
_INPUT_BUF_BUDGET = 8 * 1024 * 1024   # per double-buffered input set


def _pow_gamma(base, gamma):
    """base**gamma with base in [0, 1].  Integer gamma -> repeated multiply
    (VPU only); fractional gamma -> EUP exp/log, guarded against log(0)."""
    g = float(gamma)
    if g == int(g) and 0 <= int(g) <= 8:
        mod = jnp.ones_like(base)
        for _ in range(int(g)):
            mod = mod * base
        return mod
    safe = jnp.maximum(base, 1e-30)
    return jnp.where(base > 0.0, jnp.exp(g * jnp.log(safe)), 0.0)


def _round_tile(tile, total):
    """Clamp a row tile to the array extent; multiples of 8 when tiling."""
    tile = int(tile)
    if tile >= total:
        return total
    tile = max(_SUBLANE, (tile // _SUBLANE) * _SUBLANE)
    return total if tile >= total else tile


# ----------------------------------------------------------------------------
# Packed path: C | 128, P = 128 // C samples per 128-lane row.
# ----------------------------------------------------------------------------
def _focal_loss_packed_kernel(logits_ref, target_ref, alpha_ref, sel_ref,
                              expand_ref, out_ref, acc_ref, *, gamma,
                              use_alpha, num_classes, pack, total_n,
                              tile_rows):
    k = pl.program_id(0)

    @pl.when(k == 0)
    def _():
        acc_ref[...] = jnp.zeros_like(acc_ref)

    x = logits_ref[...].astype(jnp.float32)             # (T, 128)
    t = target_ref[...]                                 # (T, P) int32
    sel = sel_ref[...]                                  # (128, P) segment sel.
    rows_t, lanes = x.shape

    # Shared per-row max: log-softmax is shift-invariant, so per-sample
    # results are unchanged and every exp argument stays <= 0.
    m = jnp.max(x, axis=-1, keepdims=True)
    z = x - m
    ez = jnp.exp(z)
    sum_e = jnp.dot(ez, sel, preferred_element_type=jnp.float32)     # (T, P)

    # Expand packed targets to a per-lane value (MXU: (T,P)@(P,128)) and build
    # the one-hot "hit" mask without any per-row gather.
    t_exp = jnp.dot(t.astype(jnp.float32), expand_ref[...],
                    preferred_element_type=jnp.float32)              # (T, 128)
    lane_in_seg = (jax.lax.broadcasted_iota(jnp.int32, (rows_t, lanes), 1)
                   % num_classes).astype(jnp.float32)
    hit = jnp.abs(lane_in_seg - t_exp) < 0.5                          # (T, 128)

    z_t = jnp.dot(jnp.where(hit, z, 0.0), sel,
                  preferred_element_type=jnp.float32)                 # (T, P)
    logpt = jnp.minimum(z_t - jnp.log(sum_e), 0.0)
    pt = jnp.exp(logpt)

    if use_alpha:
        a_b = jnp.broadcast_to(alpha_ref[...], (rows_t, lanes))
        at = jnp.dot(jnp.where(hit, a_b, 0.0), sel,
                     preferred_element_type=jnp.float32)              # (T, P)
        logpt = logpt * at

    mod = _pow_gamma(jnp.maximum(1.0 - pt, 0.0), gamma)

    # Mask pack padding / stale remainder rows.  This is a true select, so
    # NaN/Inf in dead rows cannot leak into the accumulator (do NOT refactor
    # to arithmetic masking `valid * loss`).
    row_idx = k * tile_rows + jax.lax.broadcasted_iota(
        jnp.int32, (rows_t, pack), 0)
    seg_idx = jax.lax.broadcasted_iota(jnp.int32, (rows_t, pack), 1)
    valid = row_idx * pack + seg_idx < total_n
    acc_ref[...] += jnp.where(valid, -mod * logpt, 0.0)

    @pl.when(k == pl.num_programs(0) - 1)
    def _():
        tot = jnp.sum(acc_ref[...], axis=0, keepdims=True)            # (1, P)
        tot = jnp.sum(tot, axis=1, keepdims=True)                     # (1, 1)
        out_ref[...] = jnp.broadcast_to(tot, out_ref.shape)


def _focal_loss_packed(logits, target_flat, alpha_arr, gamma, use_alpha,
                       tile_n):
    n, c = logits.shape
    pack = _LANE // c
    rows = -(-n // pack)
    n_pad = rows * pack
    if n_pad > n:
        logits = jnp.pad(logits, ((0, n_pad - n), (0, 0)))
        target_flat = jnp.pad(target_flat, (0, n_pad - n))
    logits_p = jnp.reshape(logits, (rows, _LANE))     # row-major: layout only
    target_p = jnp.reshape(target_flat, (rows, pack))
    alpha_t = jnp.tile(alpha_arr, (1, pack))          # (1, 128)

    lane = jnp.arange(_LANE, dtype=jnp.int32)
    sel = (lane[:, None] // c ==
           jnp.arange(pack, dtype=jnp.int32)[None, :]).astype(jnp.float32)
    expand = jnp.transpose(sel)                       # (P, 128)

    bytes_per_row = (_LANE * jnp.dtype(logits_p.dtype).itemsize
                     + _LANE * 4)                     # target lane-padded
    if tile_n is not None:
        tile_rows = max(1, int(tile_n) // pack)
    else:
        tile_rows = max(_SUBLANE,
                        (_INPUT_BUF_BUDGET // (2 * bytes_per_row))
                        // _SUBLANE * _SUBLANE)
    tile_rows = _round_tile(tile_rows, rows)
    num_tiles = -(-rows // tile_rows)

    kernel = functools.partial(
        _focal_loss_packed_kernel, gamma=float(gamma), use_alpha=use_alpha,
        num_classes=c, pack=pack, total_n=n, tile_rows=tile_rows)

    partials = pl.pallas_call(
        kernel,
        out_shape=jax.ShapeDtypeStruct((_SUBLANE, _LANE), jnp.float32),
        grid=(num_tiles,),
        in_specs=[
            pl.BlockSpec((tile_rows, _LANE), lambda k: (k, 0)),  # packed logits
            pl.BlockSpec((tile_rows, pack), lambda k: (k, 0)),   # packed target
            pl.BlockSpec((1, _LANE), lambda k: (0, 0)),          # tiled alpha
            pl.BlockSpec((_LANE, pack), lambda k: (0, 0)),       # selector S
            pl.BlockSpec((pack, _LANE), lambda k: (0, 0)),       # expander S^T
        ],
        out_specs=pl.BlockSpec((_SUBLANE, _LANE), lambda k: (0, 0)),
        scratch_shapes=[pltpu.VMEM((tile_rows, pack), jnp.float32)],
        compiler_params=pltpu.CompilerParams(
            dimension_semantics=("arbitrary",),
            vmem_limit_bytes=_VMEM_LIMIT_BYTES,
        ),
        # TODO(synk): add a leading pltpu.CORE_PARALLEL axis to split the row
        # range across v7x's two TensorCores (no-op on single-TC v5e/v6e).
    )(logits_p, target_p, alpha_t, sel, expand)
    return partials[0, 0]


# ----------------------------------------------------------------------------
# Generic path: any C.
# ----------------------------------------------------------------------------
def _focal_loss_generic_kernel(logits_ref, target_ref, alpha_ref, out_ref,
                               acc_ref, *, gamma, use_alpha, total_n, tile_n):
    k = pl.program_id(0)

    @pl.when(k == 0)
    def _():
        acc_ref[...] = jnp.zeros_like(acc_ref)

    x = logits_ref[...].astype(jnp.float32)             # (T, C)
    t = target_ref[...]                                 # (T, 1) int32
    rows_t, c = x.shape

    m = jnp.max(x, axis=-1, keepdims=True)
    z = x - m
    lse = jnp.log(jnp.sum(jnp.exp(z), axis=-1, keepdims=True))

    col = jax.lax.broadcasted_iota(jnp.int32, (rows_t, c), 1)
    hit = col == t                                       # (T, C) one-hot mask
    z_t = jnp.sum(jnp.where(hit, z, 0.0), axis=-1, keepdims=True)
    logpt = jnp.minimum(z_t - lse, 0.0)
    pt = jnp.exp(logpt)

    if use_alpha:
        a_b = jnp.broadcast_to(alpha_ref[...], (rows_t, c))
        at = jnp.sum(jnp.where(hit, a_b, 0.0), axis=-1, keepdims=True)
        logpt = logpt * at

    mod = _pow_gamma(jnp.maximum(1.0 - pt, 0.0), gamma)

    # Select (not arithmetic mask) keeps NaN/Inf from stale remainder rows out.
    row_idx = k * tile_n + jax.lax.broadcasted_iota(jnp.int32, (rows_t, 1), 0)
    valid = row_idx < total_n
    acc_ref[...] += jnp.where(valid, -mod * logpt, 0.0)

    @pl.when(k == pl.num_programs(0) - 1)
    def _():
        tot = jnp.sum(acc_ref[...], axis=0, keepdims=True)            # (1, 1)
        out_ref[...] = jnp.broadcast_to(tot, out_ref.shape)


def _focal_loss_generic(logits, target_flat, alpha_arr, gamma, use_alpha,
                        tile_n):
    n, c = logits.shape
    target2 = jnp.reshape(target_flat, (n, 1))
    c_pad = -(-c // _LANE) * _LANE
    bytes_per_row = (c_pad * jnp.dtype(logits.dtype).itemsize + _LANE * 4)
    if tile_n is None:
        tile_n = max(_SUBLANE,
                     (_INPUT_BUF_BUDGET // (2 * bytes_per_row))
                     // _SUBLANE * _SUBLANE)
    tile_n = _round_tile(tile_n, n)
    num_tiles = -(-n // tile_n)

    kernel = functools.partial(
        _focal_loss_generic_kernel, gamma=float(gamma), use_alpha=use_alpha,
        total_n=n, tile_n=tile_n)

    partials = pl.pallas_call(
        kernel,
        out_shape=jax.ShapeDtypeStruct((_SUBLANE, _LANE), jnp.float32),
        grid=(num_tiles,),
        in_specs=[
            pl.BlockSpec((tile_n, c), lambda k: (k, 0)),         # logits
            pl.BlockSpec((tile_n, 1), lambda k: (k, 0)),         # target
            pl.BlockSpec((1, c), lambda k: (0, 0)),              # alpha
        ],
        out_specs=pl.BlockSpec((_SUBLANE, _LANE), lambda k: (0, 0)),
        scratch_shapes=[pltpu.VMEM((tile_n, 1), jnp.float32)],
        compiler_params=pltpu.CompilerParams(
            dimension_semantics=("arbitrary",),
            vmem_limit_bytes=_VMEM_LIMIT_BYTES,
        ),
    )(logits, target2, alpha_arr)
    return partials[0, 0]


# ----------------------------------------------------------------------------
# Public wrapper (mirrors FocalLoss.__init__ + forward).
# ----------------------------------------------------------------------------
def focal_loss(logits, target, alpha=None, gamma=0.0, size_average=True,
               tile_n=None):
    """Pallas implementation of FocalLoss.forward.

    logits: (N, C) float array (f32 or bf16).
    target: int array with N elements (flattened, as in `target.view(-1, 1)`).
    alpha:  None, a scalar (becomes [alpha, 1-alpha]; only meaningful for
            C == 2, same quirk as the PyTorch module), or a length-C vector.
    tile_n: optional samples-per-grid-step override.
    """
    n, c = logits.shape
    target_flat = jnp.reshape(target, (-1,)).astype(jnp.int32)

    if isinstance(alpha, (float, int)) and not isinstance(alpha, bool):
        alpha = [float(alpha), 1.0 - float(alpha)]
    use_alpha = alpha is not None
    if use_alpha:
        alpha_arr = jnp.asarray(alpha, dtype=jnp.float32).reshape(1, c)
    else:
        alpha_arr = jnp.zeros((1, c), dtype=jnp.float32)   # unused placeholder

    if c <= _LANE and _LANE % c == 0:
        total = _focal_loss_packed(logits, target_flat, alpha_arr, gamma,
                                   use_alpha, tile_n)
    else:
        total = _focal_loss_generic(logits, target_flat, alpha_arr, gamma,
                                    use_alpha, tile_n)
    return total / jnp.float32(n) if size_average else total


def _focal_loss_ref(logits, target, alpha=None, gamma=0.0, size_average=True):
    """Pure-JAX reference mirroring the PyTorch module exactly."""
    target = jnp.reshape(target, (-1,)).astype(jnp.int32)
    if isinstance(alpha, (float, int)) and not isinstance(alpha, bool):
        alpha = [float(alpha), 1.0 - float(alpha)]
    logp = jax.nn.log_softmax(logits.astype(jnp.float32), axis=-1)
    logpt = jnp.take_along_axis(logp, target[:, None], axis=1)[:, 0]
    pt = jnp.exp(logpt)
    if alpha is not None:
        at = jnp.asarray(alpha, dtype=jnp.float32)[target]
        logpt = logpt * at
    loss = -1.0 * (1.0 - pt) ** float(gamma) * logpt
    return jnp.mean(loss) if size_average else jnp.sum(loss)


if __name__ == "__main__":
    key = jax.random.PRNGKey(0)
    k1, k2, k3, k4, k5, k6, k7, k8 = jax.random.split(key, 8)

    # 1) Packed path (C=4 -> 32 samples per lane row), per-class alpha,
    #    gamma=2, mean.  N=16 < pack, so half the single packed row is padding.
    N, C = 16, 4
    logits = jax.random.normal(k1, (N, C), dtype=jnp.float32)
    target = jax.random.randint(k2, (N,), 0, C, dtype=jnp.int32)
    alpha = [0.25, 0.75, 0.5, 0.5]
    out = jax.block_until_ready(
        focal_loss(logits, target, alpha=alpha, gamma=2.0, size_average=True))
    ref = _focal_loss_ref(logits, target, alpha=alpha, gamma=2.0,
                          size_average=True)
    assert jnp.allclose(out, ref, atol=1e-5, rtol=1e-5), ("case1", out, ref)

    # 2) bf16 logits, sum reduction, packed path with pack padding (N=100).
    N2, C2 = 100, 4
    logits2 = jax.random.normal(k3, (N2, C2),
                                dtype=jnp.float32).astype(jnp.bfloat16)
    target2 = jax.random.randint(k4, (N2,), 0, C2, dtype=jnp.int32)
    alpha2 = [0.1, 0.2, 0.3, 0.4]
    out2 = jax.block_until_ready(
        focal_loss(logits2, target2, alpha=alpha2, gamma=2.0,
                   size_average=False))
    ref2 = _focal_loss_ref(logits2, target2, alpha=alpha2, gamma=2.0,
                           size_average=False)
    assert jnp.allclose(out2, ref2, atol=1e-4, rtol=1e-4), ("case2", out2, ref2)

    # 3) No alpha, non-integer gamma (exp/log pow path), mean reduction.
    out3 = jax.block_until_ready(
        focal_loss(logits, target, alpha=None, gamma=1.5, size_average=True))
    ref3 = _focal_loss_ref(logits, target, alpha=None, gamma=1.5,
                           size_average=True)
    assert jnp.allclose(out3, ref3, atol=1e-5, rtol=1e-5), ("case3", out3, ref3)

    # 4) Generic path: C=10 does not divide 128; multi-tile grid with a
    #    remainder block (N=50, tile_n=16).
    N4, C4 = 50, 10
    logits4 = jax.random.normal(k5, (N4, C4), dtype=jnp.float32)
    target4 = jax.random.randint(k6, (N4,), 0, C4, dtype=jnp.int32)
    out4 = jax.block_until_ready(
        focal_loss(logits4, target4, alpha=None, gamma=2.0, size_average=True,
                   tile_n=16))
    ref4 = _focal_loss_ref(logits4, target4, alpha=None, gamma=2.0,
                           size_average=True)
    assert jnp.allclose(out4, ref4, atol=1e-5, rtol=1e-5), ("case4", out4, ref4)

    # 5) Packed path, multi-tile grid with remainder (N=1000 -> 32 packed
    #    rows, 8-row tiles), sum reduction.
    N5, C5 = 1000, 4
    logits5 = jax.random.normal(k7, (N5, C5), dtype=jnp.float32)
    target5 = jax.random.randint(k8, (N5,), 0, C5, dtype=jnp.int32)
    alpha5 = [0.1, 0.2, 0.3, 0.4]
    out5 = jax.block_until_ready(
        focal_loss(logits5, target5, alpha=alpha5, gamma=2.0,
                   size_average=False, tile_n=256))
    ref5 = _focal_loss_ref(logits5, target5, alpha=alpha5, gamma=2.0,
                           size_average=False)
    assert jnp.allclose(out5, ref5, atol=1e-4, rtol=1e-4), ("case5", out5, ref5)

    print("KERNEL_OK")
</pallas_src>

<mosaic_0001>
module attributes {stable_mosaic.version = 11 : i64} {
  func.func @_focal_loss_packed_kernel(%arg0: i32, %arg1: memref<1x128xf32, #tpu.memory_space<vmem>>, %arg2: memref<1x32xi32, #tpu.memory_space<vmem>>, %arg3: memref<1x128xf32, #tpu.memory_space<vmem>>, %arg4: memref<128x32xf32, #tpu.memory_space<vmem>>, %arg5: memref<32x128xf32, #tpu.memory_space<vmem>>, %arg6: memref<8x128xf32, #tpu.memory_space<vmem>>, %arg7: memref<1x32xf32, #tpu.memory_space<vmem>>) attributes {dimension_semantics = [#tpu.dimension_semantics<arbitrary>], iteration_bounds = array<i64: 1>, scalar_prefetch = 0 : i64, scratch_operands = 1 : i64, tpu.core_type = #tpu.core_type<tc>, window_params = [{transform_indices = @transform_0, window_bounds = array<i64: 1, 128>}, {transform_indices = @transform_1, window_bounds = array<i64: 1, 32>}, {pipeline_mode = #tpu.pipeline_mode<synchronous>, transform_indices = @transform_2, window_bounds = array<i64: 1, 128>}, {pipeline_mode = #tpu.pipeline_mode<synchronous>, transform_indices = @transform_3, window_bounds = array<i64: 128, 32>}, {pipeline_mode = #tpu.pipeline_mode<synchronous>, transform_indices = @transform_4, window_bounds = array<i64: 32, 128>}, {pipeline_mode = #tpu.pipeline_mode<synchronous>, transform_indices = @transform_5, window_bounds = array<i64: 8, 128>}]} {
    %c0_i32 = arith.constant 0 : i32
    %0 = arith.cmpi eq, %arg0, %c0_i32 : i32
    %1 = arith.extui %0 : i1 to i32
    %c0_i32_0 = arith.constant 0 : i32
    %2 = arith.cmpi ne, %1, %c0_i32_0 : i32
    scf.if %2 {
      %cst_34 = arith.constant 0.000000e+00 : f32
      %78 = vector.broadcast %cst_34 : f32 to vector<1x32xf32>
      %c0_35 = arith.constant 0 : index
      %c0_36 = arith.constant 0 : index
      %79 = vector.load %arg7[%c0_35, %c0_36] : memref<1x32xf32, #tpu.memory_space<vmem>>, vector<1x32xf32>
      tpu.vector_store %arg7[%c0_35, %c0_36], %78 {strides = array<i32>} : memref<1x32xf32, #tpu.memory_space<vmem>>, vector<1x32xf32>,
    } else {
    }
    %c0 = arith.constant 0 : index
    %c0_1 = arith.constant 0 : index
    %3 = vector.load %arg1[%c0, %c0_1] : memref<1x128xf32, #tpu.memory_space<vmem>>, vector<1x128xf32>
    %c0_2 = arith.constant 0 : index
    %c0_3 = arith.constant 0 : index
    %4 = vector.load %arg2[%c0_2, %c0_3] : memref<1x32xi32, #tpu.memory_space<vmem>>, vector<1x32xi32>
    %c0_4 = arith.constant 0 : index
    %c0_5 = arith.constant 0 : index
    %5 = vector.load %arg4[%c0_4, %c0_5] : memref<128x32xf32, #tpu.memory_space<vmem>>, vector<128x32xf32>
    %cst = arith.constant dense<0xFF800000> : vector<1xf32>
    %6 = vector.multi_reduction <maximumf>, %3, %cst [1] : vector<1x128xf32> to vector<1xf32>
    %7 = vector.shape_cast %6 : vector<1xf32> to vector<1x1xf32>
    %8 = vector.broadcast %7 : vector<1x1xf32> to vector<1x128xf32>
    %9 = arith.subf %3, %8 : vector<1x128xf32>
    %10 = math.exp %9 : vector<1x128xf32>
    %cst_6 = arith.constant dense<0.000000e+00> : vector<1x32xf32>
    %11 = tpu.matmul %10, %5, %cst_6 {dimension_numbers = #tpu.dot_dimension_numbers<[1], [0], [0], [1], [0, 0, 1, 1], [], []>} : vector<1x128xf32>, vector<128x32xf32>, vector<1x32xf32> -> vector<1x32xf32>
    %12 = arith.sitofp %4 : vector<1x32xi32> to vector<1x32xf32>
    %c0_7 = arith.constant 0 : index
    %c0_8 = arith.constant 0 : index
    %13 = vector.load %arg5[%c0_7, %c0_8] : memref<32x128xf32, #tpu.memory_space<vmem>>, vector<32x128xf32>
    %cst_9 = arith.constant dense<0.000000e+00> : vector<1x128xf32>
    %14 = tpu.matmul %12, %13, %cst_9 {dimension_numbers = #tpu.dot_dimension_numbers<[1], [0], [0], [1], [0, 0, 1, 1], [], []>} : vector<1x32xf32>, vector<32x128xf32>, vector<1x128xf32> -> vector<1x128xf32>
    %15 = tpu.iota {dimensions = array<i32: 1>} : vector<1x128xi32>
    %c4_i32 = arith.constant 4 : i32
    %c0_i32_10 = arith.constant 0 : i32
    %16 = arith.cmpi eq, %c4_i32, %c0_i32_10 : i32
    %c1_i32 = arith.constant 1 : i32
    %17 = arith.select %16, %c1_i32, %c4_i32 : i32
    %18 = vector.broadcast %17 : i32 to vector<1x128xi32>
    %19 = arith.remsi %15, %18 : vector<1x128xi32>
    %c0_i32_11 = arith.constant 0 : i32
    %20 = vector.broadcast %c0_i32_11 : i32 to vector<1x128xi32>
    %21 = arith.cmpi ne, %19, %20 : vector<1x128xi32>
    %c0_i32_12 = arith.constant 0 : i32
    %22 = vector.broadcast %c0_i32_12 : i32 to vector<1x128xi32>
    %23 = arith.cmpi slt, %19, %22 : vector<1x128xi32>
    %c0_i32_13 = arith.constant 0 : i32
    %24 = arith.cmpi slt, %17, %c0_i32_13 : i32
    %25 = vector.broadcast %24 : i1 to vector<1x128xi1>
    %26 = vector.broadcast %25 : vector<1x128xi1> to vector<1x128xi1>
    %27 = arith.xori %23, %26 : vector<1x128xi1>
    %28 = arith.andi %27, %21 : vector<1x128xi1>
    %29 = vector.broadcast %17 : i32 to vector<1x128xi32>
    %30 = arith.addi %19, %29 : vector<1x128xi32>
    %31 = arith.select %28, %30, %19 : vector<1x128xi1>, vector<1x128xi32>
    %32 = arith.sitofp %31 : vector<1x128xi32> to vector<1x128xf32>
    %33 = arith.subf %32, %14 : vector<1x128xf32>
    %34 = math.absf %33 : vector<1x128xf32>
    %cst_14 = arith.constant 5.000000e-01 : f32
    %35 = vector.broadcast %cst_14 : f32 to vector<1x128xf32>
    %36 = arith.cmpf olt, %34, %35 : vector<1x128xf32>
    %cst_15 = arith.constant 0.000000e+00 : f32
    %37 = vector.broadcast %cst_15 : f32 to vector<1x128xf32>
    %38 = arith.select %36, %9, %37 : vector<1x128xi1>, vector<1x128xf32>
    %cst_16 = arith.constant dense<0.000000e+00> : vector<1x32xf32>
    %39 = tpu.matmul %38, %5, %cst_16 {dimension_numbers = #tpu.dot_dimension_numbers<[1], [0], [0], [1], [0, 0, 1, 1], [], []>} : vector<1x128xf32>, vector<128x32xf32>, vector<1x32xf32> -> vector<1x32xf32>
    %40 = math.log %11 : vector<1x32xf32>
    %41 = arith.subf %39, %40 : vector<1x32xf32>
    %cst_17 = arith.constant 0.000000e+00 : f32
    %42 = vector.broadcast %cst_17 : f32 to vector<1x32xf32>
    %43 = arith.minimumf %41, %42 : vector<1x32xf32>
    %44 = math.exp %43 : vector<1x32xf32>
    %c0_18 = arith.constant 0 : index
    %c0_19 = arith.constant 0 : index
    %45 = vector.load %arg3[%c0_18, %c0_19] : memref<1x128xf32, #tpu.memory_space<vmem>>, vector<1x128xf32>
    %cst_20 = arith.constant 0.000000e+00 : f32
    %46 = vector.broadcast %cst_20 : f32 to vector<1x128xf32>
    %47 = arith.select %36, %45, %46 : vector<1x128xi1>, vector<1x128xf32>
    %cst_21 = arith.constant dense<0.000000e+00> : vector<1x32xf32>
    %48 = tpu.matmul %47, %5, %cst_21 {dimension_numbers = #tpu.dot_dimension_numbers<[1], [0], [0], [1], [0, 0, 1, 1], [], []>} : vector<1x128xf32>, vector<128x32xf32>, vector<1x32xf32> -> vector<1x32xf32>
    %49 = arith.mulf %43, %48 : vector<1x32xf32>
    %cst_22 = arith.constant 1.000000e+00 : f32
    %50 = vector.broadcast %cst_22 : f32 to vector<1x32xf32>
    %51 = arith.subf %50, %44 : vector<1x32xf32>
    %cst_23 = arith.constant 0.000000e+00 : f32
    %52 = vector.broadcast %cst_23 : f32 to vector<1x32xf32>
    %53 = arith.maximumf %51, %52 : vector<1x32xf32>
    %cst_24 = arith.constant 1.000000e+00 : f32
    %54 = vector.broadcast %cst_24 : f32 to vector<1x32xf32>
    %55 = arith.mulf %54, %53 : vector<1x32xf32>
    %56 = arith.mulf %55, %53 : vector<1x32xf32>
    %c1_i32_25 = arith.constant 1 : i32
    %57 = arith.muli %arg0, %c1_i32_25 : i32
    %58 = tpu.iota {dimensions = array<i32: 0>} : vector<1x32xi32>
    %59 = vector.broadcast %57 : i32 to vector<1x32xi32>
    %60 = arith.addi %59, %58 : vector<1x32xi32>
    %61 = tpu.iota {dimensions = array<i32: 1>} : vector<1x32xi32>
    %c32_i32 = arith.constant 32 : i32
    %62 = vector.broadcast %c32_i32 : i32 to vector<1x32xi32>
    %63 = arith.muli %60, %62 : vector<1x32xi32>
    %64 = arith.addi %63, %61 : vector<1x32xi32>
    %c16_i32 = arith.constant 16 : i32
    %65 = vector.broadcast %c16_i32 : i32 to vector<1x32xi32>
    %66 = arith.cmpi slt, %64, %65 : vector<1x32xi32>
    %c0_26 = arith.constant 0 : index
    %c0_27 = arith.constant 0 : index
    %67 = vector.load %arg7[%c0_26, %c0_27] : memref<1x32xf32, #tpu.memory_space<vmem>>, vector<1x32xf32>
    %cst_28 = arith.constant 0.000000e+00 : f32
    %68 = vector.broadcast %cst_28 : f32 to vector<1x32xf32>
    %69 = arith.subf %68, %56 : vector<1x32xf32>
    %70 = arith.mulf %69, %49 : vector<1x32xf32>
    %cst_29 = arith.constant 0.000000e+00 : f32
    %71 = vector.broadcast %cst_29 : f32 to vector<1x32xf32>
    %72 = arith.select %66, %70, %71 : vector<1x32xi1>, vector<1x32xf32>
    %73 = arith.addf %67, %72 : vector<1x32xf32>
    %c0_30 = arith.constant 0 : index
    %c0_31 = arith.constant 0 : index
    %74 = vector.load %arg7[%c0_30, %c0_31] : memref<1x32xf32, #tpu.memory_space<vmem>>, vector<1x32xf32>
    tpu.vector_store %arg7[%c0_30, %c0_31], %73 {strides = array<i32>} : memref<1x32xf32, #tpu.memory_space<vmem>>, vector<1x32xf32>,
    %c0_i32_32 = arith.constant 0 : i32
    %75 = arith.cmpi eq, %arg0, %c0_i32_32 : i32
    %76 = arith.extui %75 : i1 to i32
    %c0_i32_33 = arith.constant 0 : i32
    %77 = arith.cmpi ne, %76, %c0_i32_33 : i32
    scf.if %77 {
      %c0_34 = arith.constant 0 : index
      %c0_35 = arith.constant 0 : index
      %78 = vector.load %arg7[%c0_34, %c0_35] : memref<1x32xf32, #tpu.memory_space<vmem>>, vector<1x32xf32>
      %cst_36 = arith.constant dense<0.000000e+00> : vector<32xf32>
      %79 = vector.multi_reduction <add>, %78, %cst_36 [0] : vector<1x32xf32> to vector<32xf32>
      %80 = vector.shape_cast %79 : vector<32xf32> to vector<1x32xf32>
      %cst_37 = arith.constant dense<0.000000e+00> : vector<1xf32>
      %81 = vector.multi_reduction <add>, %80, %cst_37 [1] : vector<1x32xf32> to vector<1xf32>
      %82 = vector.shape_cast %81 : vector<1xf32> to vector<1x1xf32>
      %83 = vector.shape_cast %82 : vector<1x1xf32> to vector<1x1xf32>
      %84 = vector.broadcast %83 : vector<1x1xf32> to vector<8x128xf32>
      %c0_38 = arith.constant 0 : index
      %c0_39 = arith.constant 0 : index
      %85 = vector.load %arg6[%c0_38, %c0_39] : memref<8x128xf32, #tpu.memory_space<vmem>>, vector<8x128xf32>
      tpu.vector_store %arg6[%c0_38, %c0_39], %84 {strides = array<i32>} : memref<8x128xf32, #tpu.memory_space<vmem>>, vector<8x128xf32>,
    } else {
    }
    return
  }
  func.func @transform_0(%arg0: i32) -> (i32, i32) {
    %c0_i32 = arith.constant 0 : i32
    %c0_i32_0 = arith.constant 0 : i32
    return %arg0, %c0_i32 : i32, i32
  }
  func.func @transform_1(%arg0: i32) -> (i32, i32) {
    %c0_i32 = arith.constant 0 : i32
    %c0_i32_0 = arith.constant 0 : i32
    return %arg0, %c0_i32 : i32, i32
  }
  func.func @transform_2(%arg0: i32) -> (i32, i32) {
    %c0_i32 = arith.constant 0 : i32
    %c0_i32_0 = arith.constant 0 : i32
    %c0_i32_1 = arith.constant 0 : i32
    return %c0_i32, %c0_i32_0 : i32, i32
  }
  func.func @transform_3(%arg0: i32) -> (i32, i32) {
    %c0_i32 = arith.constant 0 : i32
    %c0_i32_0 = arith.constant 0 : i32
    %c0_i32_1 = arith.constant 0 : i32
    return %c0_i32, %c0_i32_0 : i32, i32
  }
  func.func @transform_4(%arg0: i32) -> (i32, i32) {
    %c0_i32 = arith.constant 0 : i32
    %c0_i32_0 = arith.constant 0 : i32
    %c0_i32_1 = arith.constant 0 : i32
    return %c0_i32, %c0_i32_0 : i32, i32
  }
  func.func @transform_5(%arg0: i32) -> (i32, i32) {
    %c0_i32 = arith.constant 0 : i32
    %c0_i32_0 = arith.constant 0 : i32
    %c0_i32_1 = arith.constant 0 : i32
    return %c0_i32, %c0_i32_0 : i32, i32
  }
}

</mosaic_0001>

<llo_original>
// kernel: tpu_custom_call.1
$region0: #{tpu_custom_call.1}
  #allocation0 [shape = 'u32[]', space=smem, size = 0x4, offset = 0x4, fixed_abs, tag = 'smem constant byte address 0x4 - core index']
  #allocation1 [shape = 'u32[72,128]{1,0:T(1,128)}', space=vmem, size = 0x9000, scoped, tag = 'internal scratch']
  #allocation2 [shape = 'f32[1,32]{1,0:T(1,128)}', space=vmem, size = 0x200, scoped, tag = 'scratch operand']
  %s0 = inlined_call_operand.vmem [shape: f32[1,128], index: 0, kind: input, shape index: {}]
  %s1 = inlined_call_operand.vmem [shape: s32[1,32], index: 1, kind: input, shape index: {}]
  %s2 = inlined_call_operand.vmem [shape: f32[1,128], index: 2, kind: input, shape index: {}]
  %s3 = inlined_call_operand.vmem [shape: f32[128,32], index: 3, kind: input, shape index: {}]
  %s4 = inlined_call_operand.vmem [shape: f32[32,128], index: 4, kind: input, shape index: {}]
  %s5 = inlined_call_operand.hbm [shape: f32[8,128], index: 5, kind: output, shape index: {}]
  %s6 = sld [smem:[#allocation0]]
  $region38: #{tpu_custom_call.1} parent=0
    _
  %s8 = ssub.s32 1, %s6
  %s9 = scalar_select 0, %s8, %s6
  $region1: #{tpu_custom_call.1} parent=0
    #allocation3 [shape = 'u8[4096]{0}', space=vmem, size = 0x1000, scoped, tag = 'output window, operand 0, single buffered']
    #allocation4 [shape = 's32[1]{0}', space=sflag, size = 0x4, scoped, tag = 'scoped memory for tpu_custom_call.1']
    %10 = vsyncpa [#allocation4], 0
    // Predicated region
    $region2: #{tpu_custom_call.1} parent=1 // pred_check
      _
    $region3: #{tpu_custom_call.1} parent=1 // pred_check_branch
      %12 = sbr.rel (0) target = $region5
    $region4: #{tpu_custom_call.1} parent=1 // pred_region
      _
    $region5: #{tpu_custom_call.1} parent=1 // pred_fallthru
      _
    // Predicated region
    $region6: #{tpu_custom_call.1} parent=1 // pred_check
      _
    $region7: #{tpu_custom_call.1} parent=1 // pred_check_branch
      %14 = sbr.rel (0) target = $region9
    $region8: #{tpu_custom_call.1} parent=1 // pred_region
      _
    $region9: #{tpu_custom_call.1} parent=1 // pred_fallthru
      _
    // Predicated region
    $region10: #{tpu_custom_call.1} parent=1 // pred_check
      _
    $region11: #{tpu_custom_call.1} parent=1 // pred_check_branch
      %16 = sbr.rel (0) target = $region13
    $region12: #{tpu_custom_call.1} parent=1 // pred_region
      _
    $region13: #{tpu_custom_call.1} parent=1 // pred_fallthru
      _
    // Predicated region
    $region14: #{tpu_custom_call.1} parent=1 // pred_check
      _
    $region15: #{tpu_custom_call.1} parent=1 // pred_check_branch
      %18 = sbr.rel (0) target = $region17
    $region16: #{tpu_custom_call.1} parent=1 // pred_region
      _
    $region17: #{tpu_custom_call.1} parent=1 // pred_fallthru
      _
    // Predicated region
    $region18: #{tpu_custom_call.1} parent=1 // pred_check
      _
    $region19: #{tpu_custom_call.1} parent=1 // pred_check_branch
      %20 = sbr.rel (0) target = $region21
    $region20: #{tpu_custom_call.1} parent=1 // pred_region
      _
    $region21: #{tpu_custom_call.1} parent=1 // pred_fallthru
      _
    %p21 = scmp.eq.s32.totalorder 0, 0
    // Predicated region
    $region22: #{tpu_custom_call.1} parent=1 // pred_check
      %p22 = pneg %p21
    $region23: #{tpu_custom_call.1} parent=1 // pred_check_branch
      %24 = sbr.rel (%p22) target = $region25
    $region24: #{tpu_custom_call.1} parent=1 // pred_region
      %vm25 = vcmask 253952
      %26 = vst.msk [vmem:[#allocation2] sm:$0x1] %vm25, 0.0
    $region25: #{tpu_custom_call.1} parent=1 // pred_fallthru
      _
    %v27 = vld [vmem:[%s0] sm:$0x1]
    %v28 = vld [vmem:[%s1] sm:$0x1]
    %v29 = vld [vmem:[%s3] sm:$0xff]
    %v30 = vld [vmem:[%s3 + $0x8] sm:$0xff]
    %v31 = vld [vmem:[%s3 + $0x10] sm:$0xff]
    %v32 = vld [vmem:[%s3 + $0x18] sm:$0xff]
    %v33 = vld [vmem:[%s3 + $0x20] sm:$0xff]
    %v34 = vld [vmem:[%s3 + $0x28] sm:$0xff]
    %v35 = vld [vmem:[%s3 + $0x30] sm:$0xff]
    %v36 = vld [vmem:[%s3 + $0x38] sm:$0xff]
    %v37 = vld [vmem:[%s3 + $0x40] sm:$0xff]
    %v38 = vld [vmem:[%s3 + $0x48] sm:$0xff]
    %v39 = vld [vmem:[%s3 + $0x50] sm:$0xff]
    %v40 = vld [vmem:[%s3 + $0x58] sm:$0xff]
    %v41 = vld [vmem:[%s3 + $0x60] sm:$0xff]
    %v42 = vld [vmem:[%s3 + $0x68] sm:$0xff]
    %v43 = vld [vmem:[%s3 + $0x70] sm:$0xff]
    %v44 = vld [vmem:[%s3 + $0x78] sm:$0xff]
    %vm45 = vcmask 1040384
    %v46 = vsel %vm45, %v27, -inf
    %47 = vmax.xlane.f32.xlu0 %v46
    %v48 = vpop.xlane.xlu0 %47
    %v49 = vsub.f32 %v27, %v48
    %v50 = vmul.f32 %v49, 1.442695
    %v51 = vpow.pop %v50
    %52 = vmatpush.msra.mxu0 %v44
    %53 = vmatpush.msra.mxu0 %v43
    %54 = vmatpush.msra.mxu0 %v42
    %55 = vmatpush.msra.mxu0 %v41
    %56 = vmatpush.msra.mxu0 %v40
    %57 = vmatpush.msra.mxu0 %v39
    %58 = vmatpush.msra.mxu0 %v38
    %59 = vmatpush.msra.mxu0 %v37
    %60 = vmatpush.msra.mxu0 %v36
    %61 = vmatpush.msra.mxu0 %v35
    %62 = vmatpush.msra.mxu0 %v34
    %63 = vmatpush.msra.mxu0 %v33
    %64 = vmatpush.msra.mxu0 %v32
    %65 = vmatpush.msra.mxu0 %v31
    %66 = vmatpush.msra.mxu0 %v30
    %67 = vmatpush.msra.mxu0 %v29
    %68 = vmatmul.f32.gmra.mxu0 %v51
    %v69 = vpop.f32.mrf.mxu0
    %v70 = vadd.f32 0.0, %v69
    %71 = vdwg.mxu0
    %v72 = vcvt.s32.f32 %v28
    %v73 = vld [vmem:[%s4] sm:$0xff]
    %v74 = vld [vmem:[%s4 + $0x8] sm:$0xff]
    %v75 = vld [vmem:[%s4 + $0x10] sm:$0xff]
    %v76 = vld [vmem:[%s4 + $0x18] sm:$0xff]
    %vm77 = vcmask 261120
    %v79 = vsel %vm77, %v72, 0
    %81 = vmatpush.msra.mxu0 0.0
    %82 = vmatpush.msra.mxu0 0.0
    %83 = vmatpush.msra.mxu0 0.0
    %84 = vmatpush.msra.mxu0 0.0
    %85 = vmatpush.msra.mxu0 0.0
    %86 = vmatpush.msra.mxu0 0.0
    %87 = vmatpush.msra.mxu0 0.0
    %88 = vmatpush.msra.mxu0 0.0
    %89 = vmatpush.msra.mxu0 0.0
    %90 = vmatpush.msra.mxu0 0.0
    %91 = vmatpush.msra.mxu0 0.0
    %92 = vmatpush.msra.mxu0 0.0
    %93 = vmatpush.msra.mxu0 %v76
    %94 = vmatpush.msra.mxu0 %v75
    %95 = vmatpush.msra.mxu0 %v74
    %96 = vmatpush.msra.mxu0 %v73
    %97 = vmatmul.f32.gmra.mxu0 %v79
    %v98 = vpop.f32.mrf.mxu0
    %v99 = vadd.f32 0.0, %v98
    %100 = vdwg.mxu0
    %v101 = vlaneseq
    %v102 = vand.u32 %v101, 127
    %vm103 = vcmp.lt.s32.totalorder %v102, 0
    %v104 = vsub.s32 0, %v102
    %v105 = vsel %vm103, %v104, %v102
    %v106 = vshrl.u32 %v105, 2
    %v107 = vand.u32 %v105, 3
    %v108 = vsub.s32 0, %v107
    %v109 = vsel %vm103, %v108, %v107
    %vm110 = vcmp.ne.s32.totalorder %v109, 0
    %vm111 = vcmp.lt.s32.totalorder %v109, 0
    %vm112 = vmand %vm111, %vm110
    %v113 = vadd.s32 %v109, 4
    %v114 = vsel %vm112, %v113, %v109
    %v115 = vcvt.s32.f32 %v114
    %v116 = vsub.f32 %v115, %v99
    %v117 = vand.u32 2147483647, %v116
    %vm118 = vcmp.lt.f32.partialorder %v117, 0.5
    %v119 = vsel %vm118, %v49, 0.0
    %120 = vmatpush.msra.mxu0 %v44
    %121 = vmatpush.msra.mxu0 %v43
    %122 = vmatpush.msra.mxu0 %v42
    %123 = vmatpush.msra.mxu0 %v41
    %124 = vmatpush.msra.mxu0 %v40
    %125 = vmatpush.msra.mxu0 %v39
    %126 = vmatpush.msra.mxu0 %v38
    %127 = vmatpush.msra.mxu0 %v37
    %128 = vmatpush.msra.mxu0 %v36
    %129 = vmatpush.msra.mxu0 %v35
    %130 = vmatpush.msra.mxu0 %v34
    %131 = vmatpush.msra.mxu0 %v33
    %132 = vmatpush.msra.mxu0 %v32
    %133 = vmatpush.msra.mxu0 %v31
    %134 = vmatpush.msra.mxu0 %v30
    %135 = vmatpush.msra.mxu0 %v29
    %136 = vmatmul.f32.gmra.mxu0 %v119
    %v137 = vpop.f32.mrf.mxu0
    %v138 = vadd.f32 0.0, %v137
    %139 = vdwg.mxu0
    %v140 = vlog2.pop %v70
    %v141 = vmul.f32 %v140, 0.6931472
    %v142 = vsub.f32 %v138, %v141
    %v143 = vmin.f32 %v142, 0.0
    %v144 = vmul.f32 %v143, 1.442695
    %v145 = vpow.pop %v144
    %v146 = vld [vmem:[%s2] sm:$0x1]
    %v147 = vsel %vm118, %v146, 0.0
    %148 = vmatpush.msra.mxu0 %v44
    %149 = vmatpush.msra.mxu0 %v43
    %150 = vmatpush.msra.mxu0 %v42
    %151 = vmatpush.msra.mxu0 %v41
    %152 = vmatpush.msra.mxu0 %v40
    %153 = vmatpush.msra.mxu0 %v39
    %154 = vmatpush.msra.mxu0 %v38
    %155 = vmatpush.msra.mxu0 %v37
    %156 = vmatpush.msra.mxu0 %v36
    %157 = vmatpush.msra.mxu0 %v35
    %158 = vmatpush.msra.mxu0 %v34
    %159 = vmatpush.msra.mxu0 %v33
    %160 = vmatpush.msra.mxu0 %v32
    %161 = vmatpush.msra.mxu0 %v31
    %162 = vmatpush.msra.mxu0 %v30
    %163 = vmatpush.msra.mxu0 %v29
    %164 = vmatmul.f32.gmra.mxu0 %v147
    %v165 = vpop.f32.mrf.mxu0
    %v166 = vadd.f32 0.0, %v165
    %167 = vdwg.mxu0
    %v168 = vmul.f32 %v143, %v166
    %v169 = vsub.f32 1.0, %v145
    %v170 = vmax.f32 %v169, 0.0
    %v171 = vmul.f32 %v170, %v170
    %v172 = vlaneseq
    %v173 = vshrl.u32 %v172, 7
    %v174 = vstv 0
    %v175 = vadd.s32 %v174, %v173
    %v176 = vmul.u32 %v175, 32
    %v177 = vadd.s32 %v176, %v102
    %vm178 = vcmp.lt.s32.totalorder %v177, 16
    %v179 = vld [vmem:[#allocation2] sm:$0x1]
    %v180 = vsub.f32 0.0, %v171
    %v181 = vmul.f32 %v180, %v168
    %v182 = vsel %vm178, %v181, 0.0
    %v183 = vadd.f32 %v179, %v182
    %vm184 = vcmask 253952
    %185 = vst.msk [vmem:[#allocation2] sm:$0x1] %vm184, %v183
    // Predicated region
    $region26: #{tpu_custom_call.1} parent=1 // pred_check
      %p186 = pneg %p21
    $region27: #{tpu_custom_call.1} parent=1 // pred_check_branch
      %188 = sbr.rel (%p186) target = $region29
    $region28: #{tpu_custom_call.1} parent=1 // pred_region
      %v189 = vld [vmem:[#allocation2] sm:$0x1]
      %v190 = vadd.f32 %v189, 0.0
      %v191 = vsel %vm184, %v190, 0.0
      %192 = vadd.xlane.f32.xlu0 %v191
      %v193 = vpop.xlane.xlu0 %192
      %v194 = vperm.slane %v193, 0
      %195 = vst [vmem:[#allocation3] sm:$0xff] %v194
    $region29: #{tpu_custom_call.1} parent=1 // pred_fallthru
      _
    // Predicated region
    $region30: #{tpu_custom_call.1} parent=1 // pred_check
      _
    $region31: #{tpu_custom_call.1} parent=1 // pred_check_branch
      %197 = sbr.rel (0) target = $region33
    $region32: #{tpu_custom_call.1} parent=1 // pred_region
      %199 = vsyncadd [#allocation4], 0
      %s201 = sshll.u32 [#allocation3], 4
      %s202 = int_to_ptr.vmem [resolvable:$true] %s201
      %s203 = sshll.u32 %s5, 4
      %s204 = int_to_ptr.hbm [resolvable:$true] %s203
      %206 = dma.vmem_to_hbm [thread:$0]  %s202, 128, %s204, [#allocation4]
    $region33: #{tpu_custom_call.1} parent=1 // pred_fallthru
      _
    // Predicated region
    $region34: #{tpu_custom_call.1} parent=1 // pred_check
      _
    $region35: #{tpu_custom_call.1} parent=1 // pred_check_branch
      %208 = sbr.rel (0) target = $region37
    $region36: #{tpu_custom_call.1} parent=1 // pred_region
      %210 = dma.done [#allocation4], 128
    $region37: #{tpu_custom_call.1} parent=1 // pred_fallthru
      _
    %211 = vsyncpa [#allocation4], 1

</llo_original>
